<compile_context>
chip_gen: v6e
topology: v6e:2x2x1
jax: 0.10.0
libtpu: 0.0.40
codegen_flags: <defaults>
</compile_context>

<pallas_src>
import functools

import jax
import jax.numpy as jnp
from jax import lax
from jax.experimental import pallas as pl
from jax.experimental.pallas import tpu as pltpu


_EPS = 1e-5
_INV_SQRT2 = 0.7071067811865476


@functools.lru_cache(maxsize=None)
def _vmem_budget_and_limit():
    """Generation-aware VMEM sizing (v5e/v6e: 128 MiB, v7x: 64 MiB per core)."""
    cap = 64 * 1024 * 1024  # conservative fallback = smallest-VMEM generation
    try:
        info = pltpu.get_tpu_info()
        cap = int(getattr(info, "vmem_capacity_bytes", cap)) or cap
    except Exception:
        pass  # hardware query unavailable -> keep conservative cap
    limit = max(cap - 16 * 1024 * 1024, 32 * 1024 * 1024)
    budget = max(limit - 8 * 1024 * 1024, 24 * 1024 * 1024)
    return budget, limit


def _gelu(h, exact):
    if exact:
        # Exact erf GELU (torch.nn.GELU() default), f32.
        return 0.5 * h * (1.0 + lax.erf(h * _INV_SQRT2))
    # tanh-approx GELU: transcendental lands on the EUP slot; used on the bf16
    # fast path where the approximation error is below bf16 rounding noise.
    return jax.nn.gelu(h, approximate=True)


# ----------------------------- kernels --------------------------------------


def _prenorm_generic_kernel(x_ref, w1_ref, b1_ref, w2_ref, b2_ref, o_ref, *,
                            hidden_chunk, d_true, exact_gelu):
    """Generic path: one (tile, Dp) block of flattened rows (Dp = lane-padded C).

    LayerNorm affine is pre-folded into w1/b1. LN stats and the residual stay
    f32; matmul operands use the weights' dtype; GELU is bf16/tanh on the fast
    path. Hidden dim is processed in 128-aligned chunks.
    """
    x = x_ref[...].astype(jnp.float32)                      # (tile, Dp)
    dp = x_ref.shape[-1]
    inv_d = 1.0 / d_true

    if dp == d_true:
        mean = jnp.mean(x, axis=-1, keepdims=True)
        xc = x - mean
        var = jnp.mean(xc * xc, axis=-1, keepdims=True)
    else:
        # Lane-padded channels: stats over the true C only (padded lanes are 0).
        lane = lax.broadcasted_iota(jnp.int32, (1, dp), 1)
        valid = lane < d_true
        mean = jnp.sum(x, axis=-1, keepdims=True) * inv_d
        xc = jnp.where(valid, x - mean, 0.0)
        var = jnp.sum(xc * xc, axis=-1, keepdims=True) * inv_d

    y = xc * lax.rsqrt(var + _EPS)                          # affine folded into w1/b1
    ym = y.astype(w1_ref.dtype)                             # MXU operand dtype

    hidden = w1_ref.shape[1]
    n_chunks = hidden // hidden_chunk
    acc_t = jnp.float32 if exact_gelu else w1_ref.dtype     # GELU compute dtype

    out = x + b2_ref[...]                                   # residual + out bias (f32)
    for c in range(n_chunks):                               # static unroll, small count
        sl = pl.ds(c * hidden_chunk, hidden_chunk)          # 128-aligned static slice
        h = jnp.dot(ym, w1_ref[:, sl],
                    preferred_element_type=acc_t) + b1_ref[:, sl].astype(acc_t)
        h = _gelu(h, exact_gelu)
        out = out + jnp.dot(h.astype(w2_ref.dtype), w2_ref[sl, :],
                            preferred_element_type=jnp.float32)
    o_ref[...] = out.astype(o_ref.dtype)


def _prenorm_packed_kernel(x_ref, w1_ref, b1_ref, w2_ref, b2_ref, o_ref, *,
                           d, exact_gelu):
    """Small-channel lane-packed path.

    G = 128 // C logical rows share one 128-lane row; w1/w2 are block-diagonal
    packings so all loads/stores stay lane-dense. Per-logical-row LayerNorm
    stats come from an XLU roll-tree (log2(C) roll+select+add steps) instead of
    serialized f32 segment matmuls, keeping the MXU free for the Linears.
    """
    x = x_ref[...].astype(jnp.float32)                      # (tile, 128)
    width = x_ref.shape[-1]
    lane = lax.broadcasted_iota(jnp.int32, (1, width), 1)

    def group_sum(v):
        # Butterfly all-reduce within each aligned group of `d` lanes.
        s = 1
        while s < d:
            fwd = pltpu.roll(v, shift=width - s, axis=1)    # value from lane i+s
            bwd = pltpu.roll(v, shift=s, axis=1)            # value from lane i-s
            v = v + jnp.where((lane & s) == 0, fwd, bwd)
            s *= 2
        return v

    inv_d = 1.0 / d
    mean = group_sum(x) * inv_d
    xc = x - mean
    var = group_sum(xc * xc) * inv_d
    y = xc * lax.rsqrt(var + _EPS)                          # affine folded into w1/b1
    ym = y.astype(w1_ref.dtype)

    acc_t = jnp.float32 if exact_gelu else w1_ref.dtype
    h = jnp.dot(ym, w1_ref[...],
                preferred_element_type=acc_t) + b1_ref[...].astype(acc_t)
    h = _gelu(h, exact_gelu)
    out = jnp.dot(h.astype(w2_ref.dtype), w2_ref[...],
                  preferred_element_type=jnp.float32) + b2_ref[...]
    o_ref[...] = (out + x).astype(o_ref.dtype)


# --------------------------- tiling helpers ----------------------------------


def _round_up(v, m):
    return (v + m - 1) // m * m


def _pick_hidden_chunk(hidden, max_chunk):
    """Largest 128-aligned divisor of `hidden` that is <= max_chunk."""
    if hidden <= max_chunk or hidden % 128 != 0:
        return hidden
    for c in range(max_chunk - max_chunk % 128, 127, -128):
        if hidden % c == 0:
            return c
    return hidden


def _pick_row_tile(n_rows, width, hidden_chunk, hidden_total, x_bytes, w_bytes,
                   tile_rows):
    """Biggest row tile (multiple of 8) fitting the generation-aware budget."""
    budget, _ = _vmem_budget_and_limit()
    # Weights + biases are resident in VMEM exactly ONCE (memory_space=VMEM).
    weight_bytes = 2 * width * hidden_total * w_bytes + (hidden_total + width) * 4
    # Per-row: in/out tiles double-buffered by the pipeline + f32 working set
    # (x, xc, y, out) + one (row, hidden_chunk) activation slab.
    per_row = 2 * 2 * width * x_bytes + 4 * width * 4 + 2 * hidden_chunk * 4
    avail = max(budget - weight_bytes, 8 * per_row)
    tile = min(tile_rows, avail // per_row, n_rows)
    if n_rows >= 16:
        # Keep >=2 grid steps so v7x can shard the row axis across its two TCs.
        tile = min(tile, ((n_rows + 1) // 2 + 7) // 8 * 8)
    if n_rows < 8:
        return n_rows          # full extent (allowed even if < 8 sublanes)
    return max(8, (int(tile) // 8) * 8)


def _cost(rows, width, hidden_total, x_bytes, w_bytes):
    return pl.CostEstimate(
        flops=int(4 * rows * width * hidden_total),             # two matmuls
        transcendentals=int(rows * hidden_total),                # one GELU / hidden elt
        bytes_accessed=int(2 * rows * width * x_bytes
                           + 2 * width * hidden_total * w_bytes
                           + (hidden_total + width) * 4),
    )


# --------------------------- pallas_call plumbing ----------------------------


def _run_rows(kernel, x_rows, const_arrays, tile, cost):
    rows, width = x_rows.shape
    _, vmem_limit = _vmem_budget_and_limit()
    grid = (pl.cdiv(rows, tile),)
    # Constant across the grid -> whole array resident in VMEM once (no
    # per-step DMA, no double-buffering).
    const_spec = pl.BlockSpec(memory_space=pltpu.MemorySpace.VMEM)
    in_specs = [pl.BlockSpec((tile, width), lambda i: (i, 0))]
    in_specs += [const_spec] * len(const_arrays)
    fn = pl.pallas_call(
        kernel,
        out_shape=jax.ShapeDtypeStruct((rows, width), x_rows.dtype),
        grid_spec=pltpu.PrefetchScalarGridSpec(
            num_scalar_prefetch=0,
            grid=grid,
            in_specs=in_specs,
            out_specs=pl.BlockSpec((tile, width), lambda i: (i, 0)),
        ),
        compiler_params=pltpu.CompilerParams(
            # Row-parallel grid: shards steps across v7x's two TensorCores;
            # harmless on single-TC v5e/v6e.
            dimension_semantics=("parallel",),
            vmem_limit_bytes=vmem_limit,
        ),
        cost_estimate=cost,
    )
    return fn(x_rows, *const_arrays)


# ------------------------------- wrapper --------------------------------------


def prenorm_residual1(x, gamma, beta, w1, b1, w2, b2, *,
                      tile_rows=1024,
                      matmul_dtype=jnp.bfloat16,
                      max_hidden_chunk=1536,
                      exact_gelu=None):
    """PreNormResidual1 forward. x: (B, C, H, W) -> (B, C, H, W)."""
    assert x.ndim == 4
    B, C, H, W = x.shape
    D = C
    hidden = w1.shape[1]
    assert w1.shape == (D, hidden) and w2.shape == (hidden, D)
    N = B * H * W

    if exact_gelu is None:
        # f32 path: exact erf (bit-matching torch). bf16 fast path: tanh-approx
        # GELU on the EUP — error is below bf16 rounding noise.
        exact_gelu = jnp.dtype(matmul_dtype) == jnp.dtype(jnp.float32)

    gamma = gamma.reshape(1, D).astype(jnp.float32)
    beta = beta.reshape(1, D).astype(jnp.float32)
    b1 = b1.reshape(1, hidden).astype(jnp.float32)
    b2 = b2.reshape(1, D).astype(jnp.float32)
    w1 = w1.astype(jnp.float32)
    w2 = w2.astype(jnp.float32)

    # Fold the LayerNorm affine into the first Linear (one-time, zero runtime):
    #   (y*gamma + beta) @ W1 + b1 == y @ (gamma[:,None]*W1) + (beta @ W1 + b1)
    w1_f = w1 * gamma.reshape(D, 1)
    b1_f = jnp.dot(beta, w1, precision=lax.Precision.HIGHEST) + b1

    x_bytes = jnp.dtype(x.dtype).itemsize
    w_bytes = jnp.dtype(matmul_dtype).itemsize

    flat = x.reshape(N, D)  # raw row-major reshape, matches torch .reshape on NCHW

    group = 128 // D if (D < 128 and 128 % D == 0) else 1
    if group > 1 and N % group == 0:
        # ---- Small-channel lane-packed path (lane-dense loads/stores) ----
        rows = N // group
        width = group * D            # == 128
        hid_p = group * hidden
        eye = jnp.eye(group, dtype=jnp.float32)
        w1_p = jnp.kron(eye, w1_f).astype(matmul_dtype)      # (128, group*hidden)
        w2_p = jnp.kron(eye, w2).astype(matmul_dtype)        # (group*hidden, 128)
        b1_p = jnp.tile(b1_f, (1, group))                    # (1, group*hidden) f32
        b2_p = jnp.tile(b2, (1, group))                      # (1, 128) f32

        tile = _pick_row_tile(rows, width, hid_p, hid_p, x_bytes, w_bytes,
                              tile_rows)
        kernel = functools.partial(_prenorm_packed_kernel, d=D,
                                   exact_gelu=exact_gelu)
        out_rows = _run_rows(kernel, flat.reshape(rows, width),
                             (w1_p, b1_p, w2_p, b2_p), tile,
                             _cost(rows, width, hid_p, x_bytes, w_bytes))
        out_flat = out_rows.reshape(N, D)
    else:
        # ---- Generic path: pad C / hidden to 128 multiples (lane-dense) ----
        Dp = max(_round_up(D, 128), 128)
        hid_p = _round_up(hidden, 128)
        w1_c, w2_c, b1_c, b2_c, flat_p = w1_f, w2, b1_f, b2, flat
        if Dp != D or hid_p != hidden:
            w1_c = jnp.pad(w1_f, ((0, Dp - D), (0, hid_p - hidden)))
            w2_c = jnp.pad(w2, ((0, hid_p - hidden), (0, Dp - D)))
            b1_c = jnp.pad(b1_f, ((0, 0), (0, hid_p - hidden)))
            b2_c = jnp.pad(b2, ((0, 0), (0, Dp - D)))
            flat_p = jnp.pad(flat, ((0, 0), (0, Dp - D)))
        w1_c = w1_c.astype(matmul_dtype)
        w2_c = w2_c.astype(matmul_dtype)

        hidden_chunk = _pick_hidden_chunk(hid_p, max_hidden_chunk)
        tile = _pick_row_tile(N, Dp, hidden_chunk, hid_p, x_bytes, w_bytes,
                              tile_rows)
        kernel = functools.partial(_prenorm_generic_kernel,
                                   hidden_chunk=hidden_chunk, d_true=D,
                                   exact_gelu=exact_gelu)
        out_flat = _run_rows(kernel, flat_p, (w1_c, b1_c, w2_c, b2_c), tile,
                             _cost(N, Dp, hid_p, x_bytes, w_bytes))
        if Dp != D:
            out_flat = out_flat[:, :D]

    return out_flat.reshape(B, C, H, W)


# ------------------------------ reference -------------------------------------


def _reference(x, gamma, beta, w1, b1, w2, b2):
    B, C, H, W = x.shape
    flat = x.reshape(B * H * W, C).astype(jnp.float32)
    mean = jnp.mean(flat, axis=-1, keepdims=True)
    var = jnp.mean((flat - mean) ** 2, axis=-1, keepdims=True)
    y = (flat - mean) / jnp.sqrt(var + _EPS) * gamma.reshape(1, -1) + beta.reshape(1, -1)
    h = jnp.dot(y, w1, precision=lax.Precision.HIGHEST) + b1.reshape(1, -1)
    h = 0.5 * h * (1.0 + lax.erf(h * _INV_SQRT2))
    out = jnp.dot(h, w2, precision=lax.Precision.HIGHEST) + b2.reshape(1, -1) + flat
    return out.reshape(B, C, H, W)


if __name__ == "__main__":
    # ---- Case 1: module-spec shapes (small channels -> lane-packed path) ----
    B, C, H, W = 2, 4, 16, 16
    D = C
    k = jax.random.split(jax.random.PRNGKey(0), 7)
    x = jax.random.normal(k[0], (B, C, H, W), dtype=jnp.float32)
    w1 = jax.random.normal(k[1], (D, 3 * D), dtype=jnp.float32) * 0.1   # Linear(dim,3*dim).weight.T
    b1 = jax.random.normal(k[2], (1, 3 * D), dtype=jnp.float32) * 0.1
    w2 = jax.random.normal(k[3], (3 * D, D), dtype=jnp.float32) * 0.1   # Linear(3*dim,dim).weight.T
    b2 = jax.random.normal(k[4], (1, D), dtype=jnp.float32) * 0.1
    gamma = 1.0 + 0.1 * jax.random.normal(k[5], (1, D), dtype=jnp.float32)
    beta = 0.1 * jax.random.normal(k[6], (1, D), dtype=jnp.float32)

    ref = _reference(x, gamma, beta, w1, b1, w2, b2)

    # f32 MXU operands + exact erf GELU: tight check against the f32 reference.
    out = jax.block_until_ready(
        prenorm_residual1(x, gamma, beta, w1, b1, w2, b2,
                          matmul_dtype=jnp.float32))
    assert out.shape == (B, C, H, W)
    assert jnp.allclose(out, ref, atol=2e-4, rtol=2e-4), "packed f32 mismatch"

    # Default bf16 MXU operands + bf16 tanh GELU (production setting); small
    # tile forces a multi-step grid so constant-operand reuse is exercised.
    out_bf16 = jax.block_until_ready(
        prenorm_residual1(x, gamma, beta, w1, b1, w2, b2, tile_rows=8))
    assert jnp.allclose(out_bf16, ref, atol=1e-1, rtol=5e-2), "packed bf16 mismatch"

    # ---- Case 2: larger channels -> generic path with hidden-dim chunking ----
    B2, C2, H2, W2 = 2, 256, 8, 8
    D2, HID2 = C2, 3 * C2
    k2 = jax.random.split(jax.random.PRNGKey(1), 7)
    x2 = jax.random.normal(k2[0], (B2, C2, H2, W2), dtype=jnp.float32)
    w1_2 = jax.random.normal(k2[1], (D2, HID2), dtype=jnp.float32) * (D2 ** -0.5)
    b1_2 = jax.random.normal(k2[2], (1, HID2), dtype=jnp.float32) * 0.1
    w2_2 = jax.random.normal(k2[3], (HID2, D2), dtype=jnp.float32) * (HID2 ** -0.5)
    b2_2 = jax.random.normal(k2[4], (1, D2), dtype=jnp.float32) * 0.1
    gamma2 = 1.0 + 0.1 * jax.random.normal(k2[5], (1, D2), dtype=jnp.float32)
    beta2 = 0.1 * jax.random.normal(k2[6], (1, D2), dtype=jnp.float32)

    ref2 = _reference(x2, gamma2, beta2, w1_2, b1_2, w2_2, b2_2)

    # max_hidden_chunk=384 -> 2 hidden chunks; tile_rows=64 -> 2 grid steps.
    out2 = jax.block_until_ready(
        prenorm_residual1(x2, gamma2, beta2, w1_2, b1_2, w2_2, b2_2,
                          matmul_dtype=jnp.float32, tile_rows=64,
                          max_hidden_chunk=384))
    assert out2.shape == (B2, C2, H2, W2)
    assert jnp.allclose(out2, ref2, atol=2e-3, rtol=2e-3), "generic f32 mismatch"

    out2_bf16 = jax.block_until_ready(
        prenorm_residual1(x2, gamma2, beta2, w1_2, b1_2, w2_2, b2_2,
                          tile_rows=64, max_hidden_chunk=384))
    assert jnp.allclose(out2_bf16, ref2, atol=1e-1, rtol=5e-2), "generic bf16 mismatch"

    # ---- Case 3: C not a multiple/divisor of 128 -> lane-padded generic path ----
    B3, C3, H3, W3 = 2, 48, 8, 8
    D3, HID3 = C3, 3 * C3
    k3 = jax.random.split(jax.random.PRNGKey(2), 7)
    x3 = jax.random.normal(k3[0], (B3, C3, H3, W3), dtype=jnp.float32)
    w1_3 = jax.random.normal(k3[1], (D3, HID3), dtype=jnp.float32) * (D3 ** -0.5)
    b1_3 = jax.random.normal(k3[2], (1, HID3), dtype=jnp.float32) * 0.1
    w2_3 = jax.random.normal(k3[3], (HID3, D3), dtype=jnp.float32) * (HID3 ** -0.5)
    b2_3 = jax.random.normal(k3[4], (1, D3), dtype=jnp.float32) * 0.1
    gamma3 = 1.0 + 0.1 * jax.random.normal(k3[5], (1, D3), dtype=jnp.float32)
    beta3 = 0.1 * jax.random.normal(k3[6], (1, D3), dtype=jnp.float32)

    ref3 = _reference(x3, gamma3, beta3, w1_3, b1_3, w2_3, b2_3)
    out3 = jax.block_until_ready(
        prenorm_residual1(x3, gamma3, beta3, w1_3, b1_3, w2_3, b2_3,
                          matmul_dtype=jnp.float32))
    assert out3.shape == (B3, C3, H3, W3)
    assert jnp.allclose(out3, ref3, atol=2e-3, rtol=2e-3), "padded f32 mismatch"

    print("KERNEL_OK")
</pallas_src>

<mosaic_0001>
module attributes {stable_mosaic.version = 11 : i64} {
  func.func @_prenorm_packed_kernel(%arg0: i32, %arg1: memref<8x128xf32, #tpu.memory_space<vmem>>, %arg2: memref<128x384xf32, #tpu.memory_space<vmem>>, %arg3: memref<1x384xf32, #tpu.memory_space<vmem>>, %arg4: memref<384x128xf32, #tpu.memory_space<vmem>>, %arg5: memref<1x128xf32, #tpu.memory_space<vmem>>, %arg6: memref<8x128xf32, #tpu.memory_space<vmem>>) attributes {dimension_semantics = [#tpu.dimension_semantics<parallel>], iteration_bounds = array<i64: 2>, scalar_prefetch = 0 : i64, scratch_operands = 0 : i64, tpu.core_type = #tpu.core_type<tc>, window_params = [{transform_indices = @transform_0, window_bounds = array<i64: 8, 128>}, {pipeline_mode = #tpu.pipeline_mode<synchronous>, transform_indices = @transform_1, window_bounds = array<i64: 128, 384>}, {pipeline_mode = #tpu.pipeline_mode<synchronous>, transform_indices = @transform_2, window_bounds = array<i64: 1, 384>}, {pipeline_mode = #tpu.pipeline_mode<synchronous>, transform_indices = @transform_3, window_bounds = array<i64: 384, 128>}, {pipeline_mode = #tpu.pipeline_mode<synchronous>, transform_indices = @transform_4, window_bounds = array<i64: 1, 128>}, {transform_indices = @transform_5, window_bounds = array<i64: 8, 128>}]} {
    %c0 = arith.constant 0 : index
    %c0_0 = arith.constant 0 : index
    %0 = vector.load %arg1[%c0, %c0_0] : memref<8x128xf32, #tpu.memory_space<vmem>>, vector<8x128xf32>
    %1 = tpu.iota {dimensions = array<i32: 1>} : vector<1x128xi32>
    %c127_i32 = arith.constant 127 : i32
    %2 = tpu.dynamic_rotate %0 by %c127_i32 dim 1 : vector<8x128xf32>, i32 -> vector<8x128xf32>
    %c1_i32 = arith.constant 1 : i32
    %3 = tpu.dynamic_rotate %0 by %c1_i32 dim 1 : vector<8x128xf32>, i32 -> vector<8x128xf32>
    %c1_i32_1 = arith.constant 1 : i32
    %4 = vector.broadcast %c1_i32_1 : i32 to vector<1x128xi32>
    %5 = arith.andi %1, %4 : vector<1x128xi32>
    %c0_i32 = arith.constant 0 : i32
    %6 = vector.broadcast %c0_i32 : i32 to vector<1x128xi32>
    %7 = arith.cmpi eq, %5, %6 : vector<1x128xi32>
    %8 = vector.shape_cast %7 : vector<1x128xi1> to vector<1x128xi1>
    %9 = vector.broadcast %8 : vector<1x128xi1> to vector<8x128xi1>
    %10 = arith.select %9, %2, %3 : vector<8x128xi1>, vector<8x128xf32>
    %11 = arith.addf %0, %10 : vector<8x128xf32>
    %c126_i32 = arith.constant 126 : i32
    %12 = tpu.dynamic_rotate %11 by %c126_i32 dim 1 : vector<8x128xf32>, i32 -> vector<8x128xf32>
    %c2_i32 = arith.constant 2 : i32
    %13 = tpu.dynamic_rotate %11 by %c2_i32 dim 1 : vector<8x128xf32>, i32 -> vector<8x128xf32>
    %c2_i32_2 = arith.constant 2 : i32
    %14 = vector.broadcast %c2_i32_2 : i32 to vector<1x128xi32>
    %15 = arith.andi %1, %14 : vector<1x128xi32>
    %c0_i32_3 = arith.constant 0 : i32
    %16 = vector.broadcast %c0_i32_3 : i32 to vector<1x128xi32>
    %17 = arith.cmpi eq, %15, %16 : vector<1x128xi32>
    %18 = vector.shape_cast %17 : vector<1x128xi1> to vector<1x128xi1>
    %19 = vector.broadcast %18 : vector<1x128xi1> to vector<8x128xi1>
    %20 = arith.select %19, %12, %13 : vector<8x128xi1>, vector<8x128xf32>
    %21 = arith.addf %11, %20 : vector<8x128xf32>
    %cst = arith.constant 2.500000e-01 : f32
    %22 = vector.broadcast %cst : f32 to vector<8x128xf32>
    %23 = arith.mulf %21, %22 : vector<8x128xf32>
    %24 = arith.subf %0, %23 : vector<8x128xf32>
    %25 = arith.mulf %24, %24 : vector<8x128xf32>
    %c127_i32_4 = arith.constant 127 : i32
    %26 = tpu.dynamic_rotate %25 by %c127_i32_4 dim 1 : vector<8x128xf32>, i32 -> vector<8x128xf32>
    %c1_i32_5 = arith.constant 1 : i32
    %27 = tpu.dynamic_rotate %25 by %c1_i32_5 dim 1 : vector<8x128xf32>, i32 -> vector<8x128xf32>
    %c1_i32_6 = arith.constant 1 : i32
    %28 = vector.broadcast %c1_i32_6 : i32 to vector<1x128xi32>
    %29 = arith.andi %1, %28 : vector<1x128xi32>
    %c0_i32_7 = arith.constant 0 : i32
    %30 = vector.broadcast %c0_i32_7 : i32 to vector<1x128xi32>
    %31 = arith.cmpi eq, %29, %30 : vector<1x128xi32>
    %32 = vector.shape_cast %31 : vector<1x128xi1> to vector<1x128xi1>
    %33 = vector.broadcast %32 : vector<1x128xi1> to vector<8x128xi1>
    %34 = arith.select %33, %26, %27 : vector<8x128xi1>, vector<8x128xf32>
    %35 = arith.addf %25, %34 : vector<8x128xf32>
    %c126_i32_8 = arith.constant 126 : i32
    %36 = tpu.dynamic_rotate %35 by %c126_i32_8 dim 1 : vector<8x128xf32>, i32 -> vector<8x128xf32>
    %c2_i32_9 = arith.constant 2 : i32
    %37 = tpu.dynamic_rotate %35 by %c2_i32_9 dim 1 : vector<8x128xf32>, i32 -> vector<8x128xf32>
    %c2_i32_10 = arith.constant 2 : i32
    %38 = vector.broadcast %c2_i32_10 : i32 to vector<1x128xi32>
    %39 = arith.andi %1, %38 : vector<1x128xi32>
    %c0_i32_11 = arith.constant 0 : i32
    %40 = vector.broadcast %c0_i32_11 : i32 to vector<1x128xi32>
    %41 = arith.cmpi eq, %39, %40 : vector<1x128xi32>
    %42 = vector.shape_cast %41 : vector<1x128xi1> to vector<1x128xi1>
    %43 = vector.broadcast %42 : vector<1x128xi1> to vector<8x128xi1>
    %44 = arith.select %43, %36, %37 : vector<8x128xi1>, vector<8x128xf32>
    %45 = arith.addf %35, %44 : vector<8x128xf32>
    %cst_12 = arith.constant 2.500000e-01 : f32
    %46 = vector.broadcast %cst_12 : f32 to vector<8x128xf32>
    %47 = arith.mulf %45, %46 : vector<8x128xf32>
    %cst_13 = arith.constant 9.99999974E-6 : f32
    %48 = vector.broadcast %cst_13 : f32 to vector<8x128xf32>
    %49 = arith.addf %47, %48 : vector<8x128xf32>
    %50 = math.rsqrt %49 : vector<8x128xf32>
    %51 = arith.mulf %24, %50 : vector<8x128xf32>
    %c0_14 = arith.constant 0 : index
    %c0_15 = arith.constant 0 : index
    %52 = vector.load %arg2[%c0_14, %c0_15] : memref<128x384xf32, #tpu.memory_space<vmem>>, vector<128x384xf32>
    %cst_16 = arith.constant dense<0.000000e+00> : vector<8x384xf32>
    %53 = tpu.matmul %51, %52, %cst_16 {dimension_numbers = #tpu.dot_dimension_numbers<[1], [0], [0], [1], [0, 0, 1, 1], [], []>} : vector<8x128xf32>, vector<128x384xf32>, vector<8x384xf32> -> vector<8x384xf32>
    %c0_17 = arith.constant 0 : index
    %c0_18 = arith.constant 0 : index
    %54 = vector.load %arg3[%c0_17, %c0_18] : memref<1x384xf32, #tpu.memory_space<vmem>>, vector<1x384xf32>
    %55 = vector.broadcast %54 : vector<1x384xf32> to vector<8x384xf32>
    %56 = arith.addf %53, %55 : vector<8x384xf32>
    %cst_19 = arith.constant 5.000000e-01 : f32
    %57 = vector.broadcast %cst_19 : f32 to vector<8x384xf32>
    %58 = arith.mulf %57, %56 : vector<8x384xf32>
    %cst_20 = arith.constant 0.707106769 : f32
    %59 = vector.broadcast %cst_20 : f32 to vector<8x384xf32>
    %60 = arith.mulf %56, %59 : vector<8x384xf32>
    %61 = math.erf %60 : vector<8x384xf32>
    %cst_21 = arith.constant 1.000000e+00 : f32
    %62 = vector.broadcast %cst_21 : f32 to vector<8x384xf32>
    %63 = arith.addf %62, %61 : vector<8x384xf32>
    %64 = arith.mulf %58, %63 : vector<8x384xf32>
    %c0_22 = arith.constant 0 : index
    %c0_23 = arith.constant 0 : index
    %65 = vector.load %arg4[%c0_22, %c0_23] : memref<384x128xf32, #tpu.memory_space<vmem>>, vector<384x128xf32>
    %cst_24 = arith.constant dense<0.000000e+00> : vector<8x128xf32>
    %66 = tpu.matmul %64, %65, %cst_24 {dimension_numbers = #tpu.dot_dimension_numbers<[1], [0], [0], [1], [0, 0, 1, 1], [], []>} : vector<8x384xf32>, vector<384x128xf32>, vector<8x128xf32> -> vector<8x128xf32>
    %c0_25 = arith.constant 0 : index
    %c0_26 = arith.constant 0 : index
    %67 = vector.load %arg5[%c0_25, %c0_26] : memref<1x128xf32, #tpu.memory_space<vmem>>, vector<1x128xf32>
    %68 = vector.broadcast %67 : vector<1x128xf32> to vector<8x128xf32>
    %69 = arith.addf %66, %68 : vector<8x128xf32>
    %70 = arith.addf %69, %0 : vector<8x128xf32>
    %c0_27 = arith.constant 0 : index
    %c0_28 = arith.constant 0 : index
    %71 = vector.load %arg6[%c0_27, %c0_28] : memref<8x128xf32, #tpu.memory_space<vmem>>, vector<8x128xf32>
    tpu.vector_store %arg6[%c0_27, %c0_28], %70 {strides = array<i32>} : memref<8x128xf32, #tpu.memory_space<vmem>>, vector<8x128xf32>,
    return
  }
  func.func @transform_0(%arg0: i32) -> (i32, i32) {
    %c0_i32 = arith.constant 0 : i32
    %c0_i32_0 = arith.constant 0 : i32
    return %arg0, %c0_i32 : i32, i32
  }
  func.func @transform_1(%arg0: i32) -> (i32, i32) {
    %c0_i32 = arith.constant 0 : i32
    %c0_i32_0 = arith.constant 0 : i32
    %c0_i32_1 = arith.constant 0 : i32
    return %c0_i32, %c0_i32_0 : i32, i32
  }
  func.func @transform_2(%arg0: i32) -> (i32, i32) {
    %c0_i32 = arith.constant 0 : i32
    %c0_i32_0 = arith.constant 0 : i32
    %c0_i32_1 = arith.constant 0 : i32
    return %c0_i32, %c0_i32_0 : i32, i32
  }
  func.func @transform_3(%arg0: i32) -> (i32, i32) {
    %c0_i32 = arith.constant 0 : i32
    %c0_i32_0 = arith.constant 0 : i32
    %c0_i32_1 = arith.constant 0 : i32
    return %c0_i32, %c0_i32_0 : i32, i32
  }
  func.func @transform_4(%arg0: i32) -> (i32, i32) {
    %c0_i32 = arith.constant 0 : i32
    %c0_i32_0 = arith.constant 0 : i32
    %c0_i32_1 = arith.constant 0 : i32
    return %c0_i32, %c0_i32_0 : i32, i32
  }
  func.func @transform_5(%arg0: i32) -> (i32, i32) {
    %c0_i32 = arith.constant 0 : i32
    %c0_i32_0 = arith.constant 0 : i32
    return %arg0, %c0_i32 : i32, i32
  }
}

</mosaic_0001>

<llo_original>
// kernel: tpu_custom_call.1
$region0: #{tpu_custom_call.1}
  #allocation0 [shape = 'u32[]', space=smem, size = 0x4, offset = 0x4, fixed_abs, tag = 'smem constant byte address 0x4 - core index']
  #allocation1 [shape = 'u32[144,128]{1,0:T(1,128)}', space=vmem, size = 0x12000, scoped, tag = 'internal scratch']
  %s0 = inlined_call_operand.hbm [shape: f32[16,128], index: 0, kind: input, shape index: {}]
  %s1 = inlined_call_operand.hbm [shape: f32[128,384], index: 1, kind: input, shape index: {}]
  %s2 = inlined_call_operand.vmem [shape: f32[1,384], index: 2, kind: input, shape index: {}]
  %s3 = inlined_call_operand.hbm [shape: f32[384,128], index: 3, kind: input, shape index: {}]
  %s4 = inlined_call_operand.vmem [shape: f32[1,128], index: 4, kind: input, shape index: {}]
  %s5 = inlined_call_operand.hbm [shape: f32[16,128], index: 5, kind: output, shape index: {}]
  %s6 = sld [smem:[#allocation0]]
  $region65: #{tpu_custom_call.1} parent=0
    _
  %s8 = ssub.s32 1, %s6
  %s9 = scalar_select 0, %s8, %s6
  $region1: #{tpu_custom_call.1} parent=0
    #allocation2 [shape = 'u8[8192]{0}', space=vmem, size = 0x2000, scoped, tag = 'input window, operand 0']
    #allocation3 [shape = 's32[2]{0}', space=sflag, size = 0x8, scoped, tag = 'scoped memory for tpu_custom_call.1']
    #allocation4 [shape = 's32[2]{0}', space=sflag, size = 0x8, scoped, tag = 'scoped memory for tpu_custom_call.1']
    #allocation5 [shape = 'u8[196608]{0}', space=vmem, size = 0x30000, scoped, tag = 'input window, operand 1, single buffered']
    #allocation6 [shape = 's32[1]{0}', space=sflag, size = 0x4, scoped, tag = 'scoped memory for tpu_custom_call.1']
    #allocation7 [shape = 'u8[196608]{0}', space=vmem, size = 0x30000, scoped, tag = 'input window, operand 3, single buffered']
    #allocation8 [shape = 'u8[8192]{0}', space=vmem, size = 0x2000, scoped, tag = 'output window, operand 0']
    %10 = vsyncpa [#allocation3], 0
    %s11 = scalar_lea.sflag [#allocation3], 1
    %12 = vsyncpa %s11, 0
    %13 = vsyncpa [#allocation6], 0
    %14 = vsyncpa [#allocation4], 0
    %s15 = scalar_lea.sflag [#allocation4], 1
    %16 = vsyncpa %s15, 0
    loop: start=0, step=1, limit=4
    $region2: #{tpu_custom_call.1} parent=1 // loop_pre_header
      _
    $region3: #{tpu_custom_call.1} parent=1 // loop_header
      %s18 = sphi 0, %s22
      %p19 = scmp.ge.s32.totalorder %s18, 4
      %s28 = sphi 0, %s30
      %s31 = sphi 0, %s28
      %s32 = sphi 0, %s31
      %s48 = sphi 0, %s32
      %s52 = sphi 0, %s52
      %s54 = sphi 0, %s52
      %s55 = sphi 0, %s54
      %s69 = sphi 0, %s55
      %s73 = sphi 0, %s73
      %s75 = sphi 0, %s73
      %s76 = sphi 0, %s75
      %s90 = sphi 0, %s76
      %s94 = sphi 0, %s94
      %s96 = sphi 0, %s94
      %s97 = sphi 0, %s96
      %s111 = sphi 0, %s97
      %s115 = sphi 0, %s115
      %s117 = sphi 0, %s115
      %s118 = sphi 0, %s117
      %s132 = sphi 0, %s118
      %s138 = sphi 0, %s140
      %s141 = sphi 0, %s138
      %s142 = sphi 0, %s141
      %s158 = sphi 0, %s142
    $region4: #{tpu_custom_call.1} parent=1 // loop_header_branch
      %21 = sbr.rel (%p19) target = $region8
    $region5: #{tpu_custom_call.1} parent=1 // loop_body
      %s23 = ssub.s32 %s18, 1
      %s24 = ssub.s32 %s18, 2
      %s25 = sadd.s32 %s18, 1
      %s26 = ssub.s32 %s18, %s25
      %p27 = scmp.eq.s32.totalorder %s26, 0
      %s29 = sadd.s32 %s28, 1
      %s30 = scalar_select %p27, %s28, %s29
      %p33 = pneg %p27
      %p34 = scmp.eq.s32.totalorder %s18, 1
      %p35 = por %p33, %p34
      %p36 = scmp.ne.s32.totalorder %s28, %s31
      %p37 = scmp.eq.s32.totalorder %s18, 0
      %p38 = por %p36, %p37
      %p39 = scmp.ne.s32.totalorder %s28, %s31
      %p40 = scmp.eq.s32.totalorder %s23, 1
      %p41 = por %p39, %p40
      %p42 = scmp.ne.s32.totalorder %s31, %s32
      %p43 = scmp.eq.s32.totalorder %s23, 0
      %p44 = por %p42, %p43
      %p45 = scmp.ne.s32.totalorder %s31, %s32
      %p46 = scmp.eq.s32.totalorder %s24, 1
      %p47 = por %p45, %p46
      %p49 = scmp.ne.s32.totalorder %s32, %s48
      %p50 = scmp.eq.s32.totalorder %s24, 0
      %p51 = por %p49, %p50
      %s53 = sadd.s32 %s52, 1
      %p56 = scmp.eq.s32.totalorder %s18, 1
      %p57 = scmp.ne.s32.totalorder %s52, %s54
      %p58 = scmp.eq.s32.totalorder %s18, 0
      %p59 = por %p57, %p58
      %p60 = scmp.ne.s32.totalorder %s52, %s54
      %p61 = scmp.eq.s32.totalorder %s23, 1
      %p62 = por %p60, %p61
      %p63 = scmp.ne.s32.totalorder %s54, %s55
      %p64 = scmp.eq.s32.totalorder %s23, 0
      %p65 = por %p63, %p64
      %p66 = scmp.ne.s32.totalorder %s54, %s55
      %p67 = scmp.eq.s32.totalorder %s24, 1
      %p68 = por %p66, %p67
      %p70 = scmp.ne.s32.totalorder %s55, %s69
      %p71 = scmp.eq.s32.totalorder %s24, 0
      %p72 = por %p70, %p71
      %s74 = sadd.s32 %s73, 1
      %p77 = scmp.eq.s32.totalorder %s18, 1
      %p78 = scmp.ne.s32.totalorder %s73, %s75
      %p79 = scmp.eq.s32.totalorder %s18, 0
      %p80 = por %p78, %p79
      %p81 = scmp.ne.s32.totalorder %s73, %s75
      %p82 = scmp.eq.s32.totalorder %s23, 1
      %p83 = por %p81, %p82
      %p84 = scmp.ne.s32.totalorder %s75, %s76
      %p85 = scmp.eq.s32.totalorder %s23, 0
      %p86 = por %p84, %p85
      %p87 = scmp.ne.s32.totalorder %s75, %s76
      %p88 = scmp.eq.s32.totalorder %s24, 1
      %p89 = por %p87, %p88
      %p91 = scmp.ne.s32.totalorder %s76, %s90
      %p92 = scmp.eq.s32.totalorder %s24, 0
      %p93 = por %p91, %p92
      %s95 = sadd.s32 %s94, 1
      %p98 = scmp.eq.s32.totalorder %s18, 1
      %p99 = scmp.ne.s32.totalorder %s94, %s96
      %p100 = scmp.eq.s32.totalorder %s18, 0
      %p101 = por %p99, %p100
      %p102 = scmp.ne.s32.totalorder %s94, %s96
      %p103 = scmp.eq.s32.totalorder %s23, 1
      %p104 = por %p102, %p103
      %p105 = scmp.ne.s32.totalorder %s96, %s97
      %p106 = scmp.eq.s32.totalorder %s23, 0
      %p107 = por %p105, %p106
      %p108 = scmp.ne.s32.totalorder %s96, %s97
      %p109 = scmp.eq.s32.totalorder %s24, 1
      %p110 = por %p108, %p109
      %p112 = scmp.ne.s32.totalorder %s97, %s111
      %p113 = scmp.eq.s32.totalorder %s24, 0
      %p114 = por %p112, %p113
      %s116 = sadd.s32 %s115, 1
      %p119 = scmp.eq.s32.totalorder %s18, 1
      %p120 = scmp.ne.s32.totalorder %s115, %s117
      %p121 = scmp.eq.s32.totalorder %s18, 0
      %p122 = por %p120, %p121
      %p123 = scmp.ne.s32.totalorder %s115, %s117
      %p124 = scmp.eq.s32.totalorder %s23, 1
      %p125 = por %p123, %p124
      %p126 = scmp.ne.s32.totalorder %s117, %s118
      %p127 = scmp.eq.s32.totalorder %s23, 0
      %p128 = por %p126, %p127
      %p129 = scmp.ne.s32.totalorder %s117, %s118
      %p130 = scmp.eq.s32.totalorder %s24, 1
      %p131 = por %p129, %p130
      %p133 = scmp.ne.s32.totalorder %s118, %s132
      %p134 = scmp.eq.s32.totalorder %s24, 0
      %p135 = por %p133, %p134
      %s136 = ssub.s32 %s18, %s25
      %p137 = scmp.eq.s32.totalorder %s136, 0
      %s139 = sadd.s32 %s138, 1
      %s140 = scalar_select %p137, %s138, %s139
      %p143 = pneg %p137
      %p144 = scmp.eq.s32.totalorder %s18, 1
      %p145 = por %p143, %p144
      %p146 = scmp.ne.s32.totalorder %s138, %s141
      %p147 = scmp.eq.s32.totalorder %s18, 0
      %p148 = por %p146, %p147
      %p149 = scmp.ne.s32.totalorder %s138, %s141
      %p150 = scmp.eq.s32.totalorder %s23, 1
      %p151 = por %p149, %p150
      %p152 = scmp.ne.s32.totalorder %s141, %s142
      %p153 = scmp.eq.s32.totalorder %s23, 0
      %p154 = por %p152, %p153
      %p155 = scmp.ne.s32.totalorder %s141, %s142
      %p156 = scmp.eq.s32.totalorder %s24, 1
      %p157 = por %p155, %p156
      %p159 = scmp.ne.s32.totalorder %s142, %s158
      %p160 = scmp.eq.s32.totalorder %s24, 0
      %p161 = por %p159, %p160
      %p162 = scmp.le.s32.totalorder 1, %s18
      %p163 = scmp.lt.s32.totalorder %s18, 3
      %p164 = pnand %p162, %p163
      %p165 = pneg %p164
      // Predicated region
      $region9: #{tpu_custom_call.1} parent=5 // pred_check
        _
      $region10: #{tpu_custom_call.1} parent=5 // pred_check_branch
        %167 = sbr.rel (%p164) target = $region12
      $region11: #{tpu_custom_call.1} parent=5 // pred_region
        %s168 = ssub.s32 %s18, 1
        // Predicated region
        $region13: #{tpu_custom_call.1} parent=11 // pred_check
          %p169 = pneg %p65
        $region14: #{tpu_custom_call.1} parent=11 // pred_check_branch
          %171 = sbr.rel (%p169) target = $region16
        $region15: #{tpu_custom_call.1} parent=11 // pred_region
          %s173 = ssub.s32 6144, 6144
          %174 = vsyncadd [#allocation6], %s173
          %s175 = sshll.u32 [#allocation5], 4
          %s176 = int_to_ptr.vmem [resolvable:$true] %s175
          %181 = dma.hbm_to_vmem [thread:$0]  %s1, 6144, %s176, [#allocation6], 384, 384, 24
        $region16: #{tpu_custom_call.1} parent=11 // pred_fallthru
          _
        // Predicated region
        $region17: #{tpu_custom_call.1} parent=11 // pred_check
          %p182 = pneg %p86
        $region18: #{tpu_custom_call.1} parent=11 // pred_check_branch
          %184 = sbr.rel (%p182) target = $region20
        $region19: #{tpu_custom_call.1} parent=11 // pred_region
          _
        $region20: #{tpu_custom_call.1} parent=11 // pred_fallthru
          _
        // Predicated region
        $region21: #{tpu_custom_call.1} parent=11 // pred_check
          %p185 = pneg %p107
        $region22: #{tpu_custom_call.1} parent=11 // pred_check_branch
          %187 = sbr.rel (%p185) target = $region24
        $region23: #{tpu_custom_call.1} parent=11 // pred_region
          %s189 = ssub.s32 6144, 6144
          %190 = vsyncadd [#allocation6], %s189
          %s191 = sshll.u32 [#allocation7], 4
          %s192 = int_to_ptr.vmem [resolvable:$true] %s191
          %197 = dma.hbm_to_vmem [thread:$0]  %s3, 6144, %s192, [#allocation6], 128, 128, 8
        $region24: #{tpu_custom_call.1} parent=11 // pred_fallthru
          _
        // Predicated region
        $region25: #{tpu_custom_call.1} parent=11 // pred_check
          %p198 = pneg %p128
        $region26: #{tpu_custom_call.1} parent=11 // pred_check_branch
          %200 = sbr.rel (%p198) target = $region28
        $region27: #{tpu_custom_call.1} parent=11 // pred_region
          _
        $region28: #{tpu_custom_call.1} parent=11 // pred_fallthru
          _
      $region12: #{tpu_custom_call.1} parent=5 // pred_fallthru
        _
      %p201 = scmp.lt.s32.totalorder %s18, 2
      // Predicated region
      $region29: #{tpu_custom_call.1} parent=5 // pred_check
        %p202 = pneg %p201
      $region30: #{tpu_custom_call.1} parent=5 // pred_check_branch
        %204 = sbr.rel (%p202) target = $region32
      $region31: #{tpu_custom_call.1} parent=5 // pred_region
        // Predicated region
        $region33: #{tpu_custom_call.1} parent=31 // pred_check
          %p205 = pneg %p38
        $region34: #{tpu_custom_call.1} parent=31 // pred_check_branch
          %207 = sbr.rel (%p205) target = $region36
        $region35: #{tpu_custom_call.1} parent=31 // pred_region
          %s208 = sand.u32 %s28, 1
          %s209 = scalar_lea.sflag [#allocation3], %s208
          %s210 = sand.u32 %s28, 1
          %s211 = smul.addr %s210, 8
          %s212 = scalar_lea.vmem [#allocation2], %s211
          %s214 = ssub.s32 128, 128
          %215 = vsyncadd %s209, %s214
          %s216 = smul.addr %s18, 128
          %s217 = scalar_lea.hbm %s0, %s216
          %s219 = sshll.u32 %s212, 4
          %s220 = int_to_ptr.vmem [resolvable:$true] %s219
          %222 = dma.hbm_to_vmem [thread:$0]  %s217, 128, %s220, %s209
        $region36: #{tpu_custom_call.1} parent=31 // pred_fallthru
          _
      $region32: #{tpu_custom_call.1} parent=5 // pred_fallthru
        _
      %p223 = scmp.le.s32.totalorder 1, %s18
      %p224 = scmp.lt.s32.totalorder %s18, 3
      %p225 = pnand %p223, %p224
      %p226 = pneg %p225
      // Predicated region
      $region37: #{tpu_custom_call.1} parent=5 // pred_check
        _
      $region38: #{tpu_custom_call.1} parent=5 // pred_check_branch
        %228 = sbr.rel (%p225) target = $region40
      $region39: #{tpu_custom_call.1} parent=5 // pred_region
        %s229 = ssub.s32 %s18, 1
        %s230 = sand.u32 %s31, 1
        %s231 = scalar_lea.sflag [#allocation3], %s230
        %s232 = sand.u32 %s31, 1
        %s233 = smul.addr %s232, 8
        %s234 = scalar_lea.vmem [#allocation2], %s233
        // Predicated region
        $region41: #{tpu_custom_call.1} parent=39 // pred_check
          %p235 = pneg %p44
        $region42: #{tpu_custom_call.1} parent=39 // pred_check_branch
          %237 = sbr.rel (%p235) target = $region44
        $region43: #{tpu_custom_call.1} parent=39 // pred_region
          %238 = dma.done %s231, 128
        $region44: #{tpu_custom_call.1} parent=39 // pred_fallthru
          _
        // Predicated region
        $region45: #{tpu_custom_call.1} parent=39 // pred_check
          %p239 = pneg %p65
        $region46: #{tpu_custom_call.1} parent=39 // pred_check_branch
          %241 = sbr.rel (%p239) target = $region48
        $region47: #{tpu_custom_call.1} parent=39 // pred_region
          %242 = dma.done [#allocation6], 6144
        $region48: #{tpu_custom_call.1} parent=39 // pred_fallthru
          _
        // Predicated region
        $region49: #{tpu_custom_call.1} parent=39 // pred_check
          %p243 = pneg %p107
        $region50: #{tpu_custom_call.1} parent=39 // pred_check_branch
          %245 = sbr.rel (%p243) target = $region52
        $region51: #{tpu_custom_call.1} parent=39 // pred_region
          %246 = dma.done [#allocation6], 6144
        $region52: #{tpu_custom_call.1} parent=39 // pred_fallthru
          _
        %s247 = sand.u32 %s31, 1
        %s248 = scalar_lea.sflag [#allocation3], %s247
        %s249 = sand.u32 %s31, 1
        %s250 = smul.addr %s249, 8
        %s251 = scalar_lea.vmem [#allocation2], %s250
        %p252 = pneg %p44
        %p253 = pneg %p41
        %p254 = pneg %p65
        %p255 = pneg %p62
        %p256 = pneg %p86
        %p257 = pneg %p83
        %p258 = pneg %p107
        %p259 = pneg %p104
        %p260 = pneg %p128
        %p261 = pneg %p125
        %p262 = pneg %p154
        %p263 = pneg %p151
        %s264 = sand.u32 %s141, 1
        %s265 = scalar_lea.sflag [#allocation4], %s264
        %s266 = sand.u32 %s141, 1
        %s267 = smul.addr %s266, 8
        %s268 = scalar_lea.vmem [#allocation8], %s267
        %v269 = vld [vmem:[%s234] sm:$0xff]
        %v270 = vlaneseq
        %v271 = vand.u32 %v270, 127
        %272 = vrot.lane.b32.xlu0 %v269, 127
        %v273 = vpop.permute.xlu0 %272
        %274 = vrot.lane.b32.xlu0 %v269, 1
        %v275 = vpop.permute.xlu0 %274
        %v276 = vand.u32 %v271, 1
        %vm277 = vcmp.eq.s32.totalorder %v276, 0
        %v278 = vsel %vm277, 1, 0
        %vm279 = vcmp.eq.s32.totalorder %v278, 1
        %v280 = vsel %vm279, %v273, %v275
        %v281 = vadd.f32 %v269, %v280
        %282 = vrot.lane.b32.xlu0 %v281, 126
        %v283 = vpop.permute.xlu0 %282
        %284 = vrot.lane.b32.xlu0 %v281, 2
        %v285 = vpop.permute.xlu0 %284
        %v286 = vand.u32 %v271, 2
        %vm287 = vcmp.eq.s32.totalorder %v286, 0
        %v288 = vsel %vm287, 1, 0
        %vm289 = vcmp.eq.s32.totalorder %v288, 1
        %v290 = vsel %vm289, %v283, %v285
        %v291 = vadd.f32 %v281, %v290
        %v292 = vmul.f32 %v291, 0.25
        %v293 = vsub.f32 %v269, %v292
        %v294 = vmul.f32 %v293, %v293
        %295 = vrot.lane.b32.xlu0 %v294, 127
        %v296 = vpop.permute.xlu0 %295
        %297 = vrot.lane.b32.xlu0 %v294, 1
        %v298 = vpop.permute.xlu0 %297
        %v299 = vsel %vm279, %v296, %v298
        %v300 = vadd.f32 %v294, %v299
        %301 = vrot.lane.b32.xlu0 %v300, 126
        %v302 = vpop.permute.xlu0 %301
        %303 = vrot.lane.b32.xlu0 %v300, 2
        %v304 = vpop.permute.xlu0 %303
        %v305 = vsel %vm289, %v302, %v304
        %v306 = vadd.f32 %v300, %v305
        %v307 = vmul.f32 %v306, 0.25
        %v308 = vadd.f32 %v307, 1e-05
        %v309 = vrsqrt.pop %v308
        %v310 = vmul.f32 %v293, %v309
        %v311 = vld [vmem:[#allocation5] sm:$0xff]
        %v312 = vld [vmem:[#allocation5 + $0x8] sm:$0xff]
        %v313 = vld [vmem:[#allocation5 + $0x10] sm:$0xff]
        %v314 = vld [vmem:[#allocation5 + $0x18] sm:$0xff]
        %v315 = vld [vmem:[#allocation5 + $0x20] sm:$0xff]
        %v316 = vld [vmem:[#allocation5 + $0x28] sm:$0xff]
        %v317 = vld [vmem:[#allocation5 + $0x30] sm:$0xff]
        %v318 = vld [vmem:[#allocation5 + $0x38] sm:$0xff]
        %v319 = vld [vmem:[#allocation5 + $0x40] sm:$0xff]
        %v320 = vld [vmem:[#allocation5 + $0x48] sm:$0xff]
        %v321 = vld [vmem:[#allocation5 + $0x50] sm:$0xff]
        %v322 = vld [vmem:[#allocation5 + $0x58] sm:$0xff]
        %v323 = vld [vmem:[#allocation5 + $0x60] sm:$0xff]
        %v324 = vld [vmem:[#allocation5 + $0x68] sm:$0xff]
        %v325 = vld [vmem:[#allocation5 + $0x70] sm:$0xff]
        %v326 = vld [vmem:[#allocation5 + $0x78] sm:$0xff]
        %v327 = vld [vmem:[#allocation5 + $0x80] sm:$0xff]
        %v328 = vld [vmem:[#allocation5 + $0x88] sm:$0xff]
        %v329 = vld [vmem:[#allocation5 + $0x90] sm:$0xff]
        %v330 = vld [vmem:[#allocation5 + $0x98] sm:$0xff]
        %v331 = vld [vmem:[#allocation5 + $0xa0] sm:$0xff]
        %v332 = vld [vmem:[#allocation5 + $0xa8] sm:$0xff]
        %v333 = vld [vmem:[#allocation5 + $0xb0] sm:$0xff]
        %v334 = vld [vmem:[#allocation5 + $0xb8] sm:$0xff]
        %v335 = vld [vmem:[#allocation5 + $0xc0] sm:$0xff]
        %v336 = vld [vmem:[#allocation5 + $0xc8] sm:$0xff]
        %v337 = vld [vmem:[#allocation5 + $0xd0] sm:$0xff]
        %v338 = vld [vmem:[#allocation5 + $0xd8] sm:$0xff]
        %v339 = vld [vmem:[#allocation5 + $0xe0] sm:$0xff]
        %v340 = vld [vmem:[#allocation5 + $0xe8] sm:$0xff]
        %v341 = vld [vmem:[#allocation5 + $0xf0] sm:$0xff]
        %v342 = vld [vmem:[#allocation5 + $0xf8] sm:$0xff]
        %v343 = vld [vmem:[#allocation5 + $0x100] sm:$0xff]
        %v344 = vld [vmem:[#allocation5 + $0x108] sm:$0xff]
        %v345 = vld [vmem:[#allocation5 + $0x110] sm:$0xff]
        %v346 = vld [vmem:[#allocation5 + $0x118] sm:$0xff]
        %v347 = vld [vmem:[#allocation5 + $0x120] sm:$0xff]
        %v348 = vld [vmem:[#allocation5 + $0x128] sm:$0xff]
        %v349 = vld [vmem:[#allocation5 + $0x130] sm:$0xff]
        %v350 = vld [vmem:[#allocation5 + $0x138] sm:$0xff]
        %v351 = vld [vmem:[#allocation5 + $0x140] sm:$0xff]
        %v352 = vld [vmem:[#allocation5 + $0x148] sm:$0xff]
        %v353 = vld [vmem:[#allocation5 + $0x150] sm:$0xff]
        %v354 = vld [vmem:[#allocation5 + $0x158] sm:$0xff]
        %v355 = vld [vmem:[#allocation5 + $0x160] sm:$0xff]
        %v356 = vld [vmem:[#allocation5 + $0x168] sm:$0xff]
        %v357 = vld [vmem:[#allocation5 + $0x170] sm:$0xff]
        %v358 = vld [vmem:[#allocation5 + $0x178] sm:$0xff]
        %v359 = vld [vmem:[%s2] sm:$0x7]
        %v361 = vlaneseq
        %v362 = vshrl.u32 %v361, 7
        %v363 = vsub.s32 0, %v362
        %v364 = vrot.slane %v359, %v363
        %v365 = vlaneseq
        %v366 = vshrl.u32 %v365, 7
        %v367 = vsub.s32 1, %v366
        %v368 = vrot.slane %v359, %v367
        %v369 = vlaneseq
        %v370 = vshrl.u32 %v369, 7
        %v371 = vsub.s32 2, %v370
        %v372 = vrot.slane %v359, %v371
        %376 = vmatprep.subr.mxu0 %v357
        %377 = vmatpush1.msra.mxu0 %v356
        %378 = vmatprep.subr.mxu0 %v354
        %379 = vmatpush1.msra.mxu0 %v353
        %380 = vmatprep.subr.mxu0 %v351
        %381 = vmatpush1.msra.mxu0 %v350
        %382 = vmatprep.subr.mxu0 %v348
        %383 = vmatpush1.msra.mxu0 %v347
        %384 = vmatprep.subr.mxu0 %v345
        %385 = vmatpush1.msra.mxu0 %v344
        %386 = vmatprep.subr.mxu0 %v342
        %387 = vmatpush1.msra.mxu0 %v341
        %388 = vmatprep.subr.mxu0 %v339
        %389 = vmatpush1.msra.mxu0 %v338
        %390 = vmatprep.subr.mxu0 %v336
        %391 = vmatpush1.msra.mxu0 %v335
        %392 = vmatprep.subr.mxu0 %v333
        %393 = vmatpush1.msra.mxu0 %v332
        %394 = vmatprep.subr.mxu0 %v330
        %395 = vmatpush1.msra.mxu0 %v329
        %396 = vmatprep.subr.mxu0 %v327
        %397 = vmatpush1.msra.mxu0 %v326
        %398 = vmatprep.subr.mxu0 %v324
        %399 = vmatpush1.msra.mxu0 %v323
        %400 = vmatprep.subr.mxu0 %v321
        %401 = vmatpush1.msra.mxu0 %v320
        %402 = vmatprep.subr.mxu0 %v318
        %403 = vmatpush1.msra.mxu0 %v317
        %404 = vmatprep.subr.mxu0 %v315
        %405 = vmatpush1.msra.mxu0 %v314
        %406 = vmatprep.subr.mxu0 %v312
        %407 = vmatpush1.msra.mxu0 %v311
        %408 = vmatprep.subr.mxu0 0.0
        %409 = vmatpush2.msra.mxu0 0.0
        %410 = vmatprep.subr.mxu0 0.0
        %411 = vmatpush2.msra.mxu0 0.0
        %412 = vmatprep.subr.mxu0 0.0
        %413 = vmatpush2.msra.mxu0 0.0
        %414 = vmatprep.subr.mxu0 0.0
        %415 = vmatpush2.msra.mxu0 0.0
        %416 = vmatprep.subr.mxu0 0.0
        %417 = vmatpush2.msra.mxu0 0.0
        %418 = vmatprep.subr.mxu0 0.0
        %419 = vmatpush2.msra.mxu0 0.0
        %420 = vmatprep.subr.mxu0 0.0
        %421 = vmatpush2.msra.mxu0 0.0
        %422 = vmatprep.subr.mxu0 0.0
        %423 = vmatpush2.msra.mxu0 0.0
        %424 = vmatprep.subr.mxu0 0.0
        %425 = vmatpush2.msra.mxu0 0.0
        %426 = vmatprep.subr.mxu0 0.0
        %427 = vmatpush2.msra.mxu0 0.0
        %428 = vmatprep.subr.mxu0 0.0
        %429 = vmatpush2.msra.mxu0 0.0
        %430 = vmatprep.subr.mxu0 0.0
        %431 = vmatpush2.msra.mxu0 0.0
        %432 = vmatprep.subr.mxu0 0.0
        %433 = vmatpush2.msra.mxu0 0.0
        %434 = vmatprep.subr.mxu0 0.0
        %435 = vmatpush2.msra.mxu0 0.0
        %436 = vmatprep.subr.mxu0 0.0
        %437 = vmatpush2.msra.mxu0 0.0
        %438 = vmatprep.subr.mxu0 0.0
        %439 = vmatpush2.msra.mxu0 0.0
        %440 = vmatprep.mubr.f32.mxu0 0.0
        %441 = vmatmul.mubr.f32.gmra.mxu0 %v310
        %v442 = vpop.f32.mrf.mxu0
        %v443 = vadd.f32 %v364, %v442
        %v444 = vpop.f32.mrf.mxu0
        %v445 = vadd.f32 %v368, %v444
        %446 = vdwg.mxu0
        %447 = vmatprep.subr.mxu0 0.0
        %448 = vmatpush1.msra.mxu0 %v358
        %449 = vmatprep.subr.mxu0 0.0
        %450 = vmatpush1.msra.mxu0 %v355
        %451 = vmatprep.subr.mxu0 0.0
        %452 = vmatpush1.msra.mxu0 %v352
        %453 = vmatprep.subr.mxu0 0.0
        %454 = vmatpush1.msra.mxu0 %v349
        %455 = vmatprep.subr.mxu0 0.0
        %456 = vmatpush1.msra.mxu0 %v346
        %457 = vmatprep.subr.mxu0 0.0
        %458 = vmatpush1.msra.mxu0 %v343
        %459 = vmatprep.subr.mxu0 0.0
        %460 = vmatpush1.msra.mxu0 %v340
        %461 = vmatprep.subr.mxu0 0.0
        %462 = vmatpush1.msra.mxu0 %v337
        %463 = vmatprep.subr.mxu0 0.0
        %464 = vmatpush1.msra.mxu0 %v334
        %465 = vmatprep.subr.mxu0 0.0
        %466 = vmatpush1.msra.mxu0 %v331
        %467 = vmatprep.subr.mxu0 0.0
        %468 = vmatpush1.msra.mxu0 %v328
        %469 = vmatprep.subr.mxu0 0.0
        %470 = vmatpush1.msra.mxu0 %v325
        %471 = vmatprep.subr.mxu0 0.0
        %472 = vmatpush1.msra.mxu0 %v322
        %473 = vmatprep.subr.mxu0 0.0
        %474 = vmatpush1.msra.mxu0 %v319
        %475 = vmatprep.subr.mxu0 0.0
        %476 = vmatpush1.msra.mxu0 %v316
        %477 = vmatprep.subr.mxu0 0.0
        %478 = vmatpush1.msra.mxu0 %v313
        %479 = vmatprep.subr.mxu0 0.0
        %480 = vmatpush2.msra.mxu0 0.0
        %481 = vmatprep.subr.mxu0 0.0
        %482 = vmatpush2.msra.mxu0 0.0
        %483 = vmatprep.subr.mxu0 0.0
        %484 = vmatpush2.msra.mxu0 0.0
        %485 = vmatprep.subr.mxu0 0.0
        %486 = vmatpush2.msra.mxu0 0.0
        %487 = vmatprep.subr.mxu0 0.0
        %488 = vmatpush2.msra.mxu0 0.0
        %489 = vmatprep.subr.mxu0 0.0
        %490 = vmatpush2.msra.mxu0 0.0
        %491 = vmatprep.subr.mxu0 0.0
        %492 = vmatpush2.msra.mxu0 0.0
        %493 = vmatprep.subr.mxu0 0.0
        %494 = vmatpush2.msra.mxu0 0.0
        %495 = vmatprep.subr.mxu0 0.0
        %496 = vmatpush2.msra.mxu0 0.0
        %497 = vmatprep.subr.mxu0 0.0
        %498 = vmatpush2.msra.mxu0 0.0
        %499 = vmatprep.subr.mxu0 0.0
        %500 = vmatpush2.msra.mxu0 0.0
        %501 = vmatprep.subr.mxu0 0.0
        %502 = vmatpush2.msra.mxu0 0.0
        %503 = vmatprep.subr.mxu0 0.0
        %504 = vmatpush2.msra.mxu0 0.0
        %505 = vmatprep.subr.mxu0 0.0
        %506 = vmatpush2.msra.mxu0 0.0
        %507 = vmatprep.subr.mxu0 0.0
        %508 = vmatpush2.msra.mxu0 0.0
        %509 = vmatprep.subr.mxu0 0.0
        %510 = vmatpush2.msra.mxu0 0.0
        %511 = vmatprep.mubr.f32.mxu0 0.0
        %512 = vmatmul.mubr.f32.gmra.mxu0 %v310
        %v513 = vpop.f32.mrf.mxu0
        %v514 = vadd.f32 %v372, %v513
        %v515 = vpop.f32.mrf.mxu0
        %516 = vdwg.mxu0
        %v517 = vmul.f32 %v443, 0.5
        %v518 = vmul.f32 %v445, 0.5
        %v519 = vmul.f32 %v514, 0.5
        %v520 = vmul.f32 %v443, 0.70710677
        %v521 = vmul.f32 %v445, 0.70710677
        %v522 = vmul.f32 %v514, 0.70710677
        %v523 = verf.f32.pop %v520
        %v524 = verf.f32.pop %v521
        %v525 = verf.f32.pop %v522
        %v526 = vadd.f32 %v523, 1.0
        %v527 = vadd.f32 %v524, 1.0
        %v528 = vadd.f32 %v525, 1.0
        %v529 = vmul.f32 %v517, %v526
        %v530 = vmul.f32 %v518, %v527
        %v531 = vmul.f32 %v519, %v528
        %v532 = vld [vmem:[#allocation7] sm:$0xff]
        %v533 = vld [vmem:[#allocation7 + $0x8] sm:$0xff]
        %v534 = vld [vmem:[#allocation7 + $0x10] sm:$0xff]
        %v535 = vld [vmem:[#allocation7 + $0x18] sm:$0xff]
        %v536 = vld [vmem:[#allocation7 + $0x20] sm:$0xff]
        %v537 = vld [vmem:[#allocation7 + $0x28] sm:$0xff]
        %v538 = vld [vmem:[#allocation7 + $0x30] sm:$0xff]
        %v539 = vld [vmem:[#allocation7 + $0x38] sm:$0xff]
        %v540 = vld [vmem:[#allocation7 + $0x40] sm:$0xff]
        %v541 = vld [vmem:[#allocation7 + $0x48] sm:$0xff]
        %v542 = vld [vmem:[#allocation7 + $0x50] sm:$0xff]
        %v543 = vld [vmem:[#allocation7 + $0x58] sm:$0xff]
        %v544 = vld [vmem:[#allocation7 + $0x60] sm:$0xff]
        %v545 = vld [vmem:[#allocation7 + $0x68] sm:$0xff]
        %v546 = vld [vmem:[#allocation7 + $0x70] sm:$0xff]
        %v547 = vld [vmem:[#allocation7 + $0x78] sm:$0xff]
        %v548 = vld [vmem:[#allocation7 + $0x80] sm:$0xff]
        %v549 = vld [vmem:[#allocation7 + $0x88] sm:$0xff]
        %v550 = vld [vmem:[#allocation7 + $0x90] sm:$0xff]
        %v551 = vld [vmem:[#allocation7 + $0x98] sm:$0xff]
        %v552 = vld [vmem:[#allocation7 + $0xa0] sm:$0xff]
        %v553 = vld [vmem:[#allocation7 + $0xa8] sm:$0xff]
        %v554 = vld [vmem:[#allocation7 + $0xb0] sm:$0xff]
        %v555 = vld [vmem:[#allocation7 + $0xb8] sm:$0xff]
        %v556 = vld [vmem:[#allocation7 + $0xc0] sm:$0xff]
        %v557 = vld [vmem:[#allocation7 + $0xc8] sm:$0xff]
        %v558 = vld [vmem:[#allocation7 + $0xd0] sm:$0xff]
        %v559 = vld [vmem:[#allocation7 + $0xd8] sm:$0xff]
        %v560 = vld [vmem:[#allocation7 + $0xe0] sm:$0xff]
        %v561 = vld [vmem:[#allocation7 + $0xe8] sm:$0xff]
        %v562 = vld [vmem:[#allocation7 + $0xf0] sm:$0xff]
        %v563 = vld [vmem:[#allocation7 + $0xf8] sm:$0xff]
        %v564 = vld [vmem:[#allocation7 + $0x100] sm:$0xff]
        %v565 = vld [vmem:[#allocation7 + $0x108] sm:$0xff]
        %v566 = vld [vmem:[#allocation7 + $0x110] sm:$0xff]
        %v567 = vld [vmem:[#allocation7 + $0x118] sm:$0xff]
        %v568 = vld [vmem:[#allocation7 + $0x120] sm:$0xff]
        %v569 = vld [vmem:[#allocation7 + $0x128] sm:$0xff]
        %v570 = vld [vmem:[#allocation7 + $0x130] sm:$0xff]
        %v571 = vld [vmem:[#allocation7 + $0x138] sm:$0xff]
        %v572 = vld [vmem:[#allocation7 + $0x140] sm:$0xff]
        %v573 = vld [vmem:[#allocation7 + $0x148] sm:$0xff]
        %v574 = vld [vmem:[#allocation7 + $0x150] sm:$0xff]
        %v575 = vld [vmem:[#allocation7 + $0x158] sm:$0xff]
        %v576 = vld [vmem:[#allocation7 + $0x160] sm:$0xff]
        %v577 = vld [vmem:[#allocation7 + $0x168] sm:$0xff]
        %v578 = vld [vmem:[#allocation7 + $0x170] sm:$0xff]
        %v579 = vld [vmem:[#allocation7 + $0x178] sm:$0xff]
        %v580 = vld [vmem:[%s4] sm:$0x1]
        %v582 = vlaneseq
        %v583 = vshrl.u32 %v582, 7
        %v584 = vsub.s32 0, %v583
        %v585 = vrot.slane %v580, %v584
        %587 = vmatprep.subr.mxu0 0.0
        %588 = vmatpush1.msra.mxu0 %v547
        %589 = vmatprep.subr.mxu0 0.0
        %590 = vmatpush1.msra.mxu0 %v546
        %591 = vmatprep.subr.mxu0 0.0
        %592 = vmatpush1.msra.mxu0 %v545
        %593 = vmatprep.subr.mxu0 0.0
        %594 = vmatpush1.msra.mxu0 %v544
        %595 = vmatprep.subr.mxu0 0.0
        %596 = vmatpush1.msra.mxu0 %v543
        %597 = vmatprep.subr.mxu0 0.0
        %598 = vmatpush1.msra.mxu0 %v542
        %599 = vmatprep.subr.mxu0 0.0
        %600 = vmatpush1.msra.mxu0 %v541
        %601 = vmatprep.subr.mxu0 0.0
        %602 = vmatpush1.msra.mxu0 %v540
        %603 = vmatprep.subr.mxu0 0.0
        %604 = vmatpush1.msra.mxu0 %v539
        %605 = vmatprep.subr.mxu0 0.0
        %606 = vmatpush1.msra.mxu0 %v538
        %607 = vmatprep.subr.mxu0 0.0
        %608 = vmatpush1.msra.mxu0 %v537
        %609 = vmatprep.subr.mxu0 0.0
        %610 = vmatpush1.msra.mxu0 %v536
        %611 = vmatprep.subr.mxu0 0.0
        %612 = vmatpush1.msra.mxu0 %v535
        %613 = vmatprep.subr.mxu0 0.0
        %614 = vmatpush1.msra.mxu0 %v534
        %615 = vmatprep.subr.mxu0 0.0
        %616 = vmatpush1.msra.mxu0 %v533
        %617 = vmatprep.subr.mxu0 0.0
        %618 = vmatpush1.msra.mxu0 %v532
        %619 = vmatprep.subr.mxu0 0.0
        %620 = vmatpush2.msra.mxu0 %v563
        %621 = vmatprep.subr.mxu0 0.0
        %622 = vmatpush2.msra.mxu0 %v562
        %623 = vmatprep.subr.mxu0 0.0
        %624 = vmatpush2.msra.mxu0 %v561
        %625 = vmatprep.subr.mxu0 0.0
        %626 = vmatpush2.msra.mxu0 %v560
        %627 = vmatprep.subr.mxu0 0.0
        %628 = vmatpush2.msra.mxu0 %v559
        %629 = vmatprep.subr.mxu0 0.0
        %630 = vmatpush2.msra.mxu0 %v558
        %631 = vmatprep.subr.mxu0 0.0
        %632 = vmatpush2.msra.mxu0 %v557
        %633 = vmatprep.subr.mxu0 0.0
        %634 = vmatpush2.msra.mxu0 %v556
        %635 = vmatprep.subr.mxu0 0.0
        %636 = vmatpush2.msra.mxu0 %v555
        %637 = vmatprep.subr.mxu0 0.0
        %638 = vmatpush2.msra.mxu0 %v554
        %639 = vmatprep.subr.mxu0 0.0
        %640 = vmatpush2.msra.mxu0 %v553
        %641 = vmatprep.subr.mxu0 0.0
        %642 = vmatpush2.msra.mxu0 %v552
        %643 = vmatprep.subr.mxu0 0.0
        %644 = vmatpush2.msra.mxu0 %v551
        %645 = vmatprep.subr.mxu0 0.0
        %646 = vmatpush2.msra.mxu0 %v550
        %647 = vmatprep.subr.mxu0 0.0
        %648 = vmatpush2.msra.mxu0 %v549
        %649 = vmatprep.subr.mxu0 0.0
        %650 = vmatpush2.msra.mxu0 %v548
        %651 = vmatprep.mubr.f32.mxu0 %v530
        %652 = vmatmul.mubr.f32.gmra.mxu0 %v529
        %v653 = vpop.f32.mrf.mxu0
        %v654 = vadd.f32 %v585, %v653
        %v655 = vpop.f32.mrf.mxu0
        %656 = vdwg.mxu0
        %657 = vmatprep.subr.mxu0 0.0
        %658 = vmatpush1.msra.mxu0 %v579
        %659 = vmatprep.subr.mxu0 0.0
        %660 = vmatpush1.msra.mxu0 %v578
        %661 = vmatprep.subr.mxu0 0.0
        %662 = vmatpush1.msra.mxu0 %v577
        %663 = vmatprep.subr.mxu0 0.0
        %664 = vmatpush1.msra.mxu0 %v576
        %665 = vmatprep.subr.mxu0 0.0
        %666 = vmatpush1.msra.mxu0 %v575
        %667 = vmatprep.subr.mxu0 0.0
        %668 = vmatpush1.msra.mxu0 %v574
        %669 = vmatprep.subr.mxu0 0.0
        %670 = vmatpush1.msra.mxu0 %v573
        %671 = vmatprep.subr.mxu0 0.0
        %672 = vmatpush1.msra.mxu0 %v572
        %673 = vmatprep.subr.mxu0 0.0
        %674 = vmatpush1.msra.mxu0 %v571
        %675 = vmatprep.subr.mxu0 0.0
        %676 = vmatpush1.msra.mxu0 %v570
        %677 = vmatprep.subr.mxu0 0.0
        %678 = vmatpush1.msra.mxu0 %v569
        %679 = vmatprep.subr.mxu0 0.0
        %680 = vmatpush1.msra.mxu0 %v568
        %681 = vmatprep.subr.mxu0 0.0
        %682 = vmatpush1.msra.mxu0 %v567
        %683 = vmatprep.subr.mxu0 0.0
        %684 = vmatpush1.msra.mxu0 %v566
        %685 = vmatprep.subr.mxu0 0.0
        %686 = vmatpush1.msra.mxu0 %v565
        %687 = vmatprep.subr.mxu0 0.0
        %688 = vmatpush1.msra.mxu0 %v564
        %689 = vmatprep.subr.mxu0 0.0
        %690 = vmatpush2.msra.mxu0 0.0
        %691 = vmatprep.subr.mxu0 0.0
        %692 = vmatpush2.msra.mxu0 0.0
        %693 = vmatprep.subr.mxu0 0.0
        %694 = vmatpush2.msra.mxu0 0.0
        %695 = vmatprep.subr.mxu0 0.0
        %696 = vmatpush2.msra.mxu0 0.0
        %697 = vmatprep.subr.mxu0 0.0
        %698 = vmatpush2.msra.mxu0 0.0
        %699 = vmatprep.subr.mxu0 0.0
        %700 = vmatpush2.msra.mxu0 0.0
        %701 = vmatprep.subr.mxu0 0.0
        %702 = vmatpush2.msra.mxu0 0.0
        %703 = vmatprep.subr.mxu0 0.0
        %704 = vmatpush2.msra.mxu0 0.0
        %705 = vmatprep.subr.mxu0 0.0
        %706 = vmatpush2.msra.mxu0 0.0
        %707 = vmatprep.subr.mxu0 0.0
        %708 = vmatpush2.msra.mxu0 0.0
        %709 = vmatprep.subr.mxu0 0.0
        %710 = vmatpush2.msra.mxu0 0.0
        %711 = vmatprep.subr.mxu0 0.0
        %712 = vmatpush2.msra.mxu0 0.0
        %713 = vmatprep.subr.mxu0 0.0
        %714 = vmatpush2.msra.mxu0 0.0
        %715 = vmatprep.subr.mxu0 0.0
        %716 = vmatpush2.msra.mxu0 0.0
        %717 = vmatprep.subr.mxu0 0.0
        %718 = vmatpush2.msra.mxu0 0.0
        %719 = vmatprep.subr.mxu0 0.0
        %720 = vmatpush2.msra.mxu0 0.0
        %721 = vmatprep.mubr.f32.mxu0 0.0
        %722 = vmatmul.mubr.f32.gmra.mxu0 %v531
        %v723 = vpop.f32.mrf.mxu0
        %v724 = vadd.f32 %v654, %v723
        %v725 = vpop.f32.mrf.mxu0
        %726 = vdwg.mxu0
        %v727 = vadd.f32 %v724, %v269
        %728 = vst [vmem:[%s268] sm:$0xff] %v727
        %s729 = sand.u32 %s141, 1
        %s730 = scalar_lea.sflag [#allocation4], %s729
        %s731 = sand.u32 %s141, 1
        %s732 = smul.addr %s731, 8
        %s733 = scalar_lea.vmem [#allocation8], %s732
        // Predicated region
        $region53: #{tpu_custom_call.1} parent=39 // pred_check
          %p734 = pneg %p151
        $region54: #{tpu_custom_call.1} parent=39 // pred_check_branch
          %736 = sbr.rel (%p734) target = $region56
        $region55: #{tpu_custom_call.1} parent=39 // pred_region
          %s738 = ssub.s32 128, 128
          %739 = vsyncadd %s730, %s738
          %s740 = smul.addr %s23, 128
          %s741 = scalar_lea.hbm %s5, %s740
          %s743 = sshll.u32 %s733, 4
          %s744 = int_to_ptr.vmem [resolvable:$true] %s743
          %746 = dma.vmem_to_hbm [thread:$0]  %s744, 128, %s741, %s730
        $region56: #{tpu_custom_call.1} parent=39 // pred_fallthru
          _
      $region40: #{tpu_custom_call.1} parent=5 // pred_fallthru
        _
      %p747 = scmp.le.s32.totalorder 2, %s18
      // Predicated region
      $region57: #{tpu_custom_call.1} parent=5 // pred_check
        %p748 = pneg %p747
      $region58: #{tpu_custom_call.1} parent=5 // pred_check_branch
        %750 = sbr.rel (%p748) target = $region60
      $region59: #{tpu_custom_call.1} parent=5 // pred_region
        %s751 = ssub.s32 %s18, 2
        // Predicated region
        $region61: #{tpu_custom_call.1} parent=59 // pred_check
          %p752 = pneg %p157
        $region62: #{tpu_custom_call.1} parent=59 // pred_check_branch
          %754 = sbr.rel (%p752) target = $region64
        $region63: #{tpu_custom_call.1} parent=59 // pred_region
          %s755 = sand.u32 %s142, 1
          %s756 = scalar_lea.sflag [#allocation4], %s755
          %s757 = sand.u32 %s142, 1
          %s758 = smul.addr %s757, 8
          %s759 = scalar_lea.vmem [#allocation8], %s758
          %760 = dma.done %s756, 128
        $region64: #{tpu_custom_call.1} parent=59 // pred_fallthru
          _
      $region60: #{tpu_custom_call.1} parent=5 // pred_fallthru
        _
    $region6: #{tpu_custom_call.1} parent=1 // loop_footer
      %s22 = sadd.s32 1, %s18
    $region7: #{tpu_custom_call.1} parent=1 // loop_footer_branch
      %17 = sbr.rel target = $region3
    $region8: #{tpu_custom_call.1} parent=1 // loop_exit
      _
    %761 = vsyncpa [#allocation3], 1
    %s762 = scalar_lea.sflag [#allocation3], 1
    %763 = vsyncpa %s762, 1
    %764 = vsyncpa [#allocation6], 1
    %765 = vsyncpa [#allocation4], 1
    %s766 = scalar_lea.sflag [#allocation4], 1
    %767 = vsyncpa %s766, 1

</llo_original>
